<compile_context>
chip_gen: v6e
topology: v6e:2x2x1
jax: 0.10.0
libtpu: 0.0.40
codegen_flags: <defaults>
</compile_context>

<pallas_src>
import math

import jax
import jax.numpy as jnp
from jax.experimental import pallas as pl
from jax.experimental.pallas import tpu as pltpu


# --------------------------------- kernel -----------------------------------
# Single grid step processes the whole (lane-dense) batch.
#   xs_ref : (3*C_in, B*L)  pre-shifted, tap-stacked input
#   w1_ref : (C_out, 3*C_in) BN-folded conv1 weight, taps stacked along columns
#   b1_ref : (C_out, 1)      BN-folded conv1 bias
#   w2_ref : (3*C_out, C_out) BN-folded conv2 weight, taps stacked along rows
#   b2_ref : (C_out, 1)
#   sr_ref : (B*L, B*L) block-diagonal shift-right matrix (constant)
#   sl_ref : (B*L, B*L) block-diagonal shift-left  matrix (constant)
#   out_ref: (C_out, B*L)

def _double_conv1d_kernel(xs_ref, w1_ref, b1_ref, w2_ref, b2_ref,
                          sr_ref, sl_ref, out_ref):
    c_out = b1_ref.shape[0]

    # ----- conv1 + BN1 + ReLU: single MXU matmul (taps pre-shifted in wrapper)
    h = jnp.dot(w1_ref[...], xs_ref[...],
                preferred_element_type=jnp.float32) + b1_ref[...]
    h = jnp.maximum(h, 0.0)                                   # (C_out, B*L)

    # ----- conv2 + BN2 + ReLU: stacked-tap matmul + two shift matmuls
    # w2 rows: [0:C_out]=tap0, [C_out:2C_out]=tap1, [2C_out:3C_out]=tap2
    p = jnp.dot(w2_ref[...], h, preferred_element_type=jnp.float32)  # (3*C_out, B*L)
    y = (jnp.dot(p[:c_out], sr_ref[...], preferred_element_type=jnp.float32)
         + p[c_out:2 * c_out]
         + jnp.dot(p[2 * c_out:], sl_ref[...], preferred_element_type=jnp.float32)
         + b2_ref[...])
    out_ref[...] = jnp.maximum(y, 0.0)


# -------------------------------- wrapper ------------------------------------

def _fold_bn(w, b, gamma, beta, mean, var, eps=1e-5):
    """Fold eval-mode BatchNorm into conv weight (C_out, C_in, 3) and bias."""
    scale = gamma * jax.lax.rsqrt(var + eps)          # (C_out,)
    w_f = w * scale[:, None, None]
    b_f = (b - mean) * scale + beta
    return w_f, b_f


def _block_diag_shift_mats(B, L):
    """Block-diagonal (B*L, B*L) shift-right / shift-left matrices (f32)."""
    n = B * L
    row = jnp.arange(n)[:, None]
    col = jnp.arange(n)[None, :]
    same_block = (row // L) == (col // L)
    s_r = ((col == row + 1) & same_block).astype(jnp.float32)   # p @ s_r -> shift right
    s_l = ((col == row - 1) & same_block).astype(jnp.float32)   # p @ s_l -> shift left
    return s_r, s_l


def double_conv1d_forward(x, p):
    """x: (B, C_in, L) float32 -> (B, C_out, L) float32."""
    B, C_in, L = x.shape
    C_out = p["w1"].shape[0]
    BL = B * L

    # Fold BatchNorm into the conv weights (eval-mode running statistics).
    w1, b1 = _fold_bn(p["w1"], p["b1"], p["g1"], p["beta1"], p["m1"], p["v1"])
    w2, b2 = _fold_bn(p["w2"], p["b2"], p["g2"], p["beta2"], p["m2"], p["v2"])

    # Layer-1: pre-shift x along L (zero padded) and stack taps along channels
    # so the first conv is a single matmul inside the kernel.
    x0 = jnp.pad(x, ((0, 0), (0, 0), (1, 0)))[:, :, :L]   # x[l-1] (tap 0)
    x2 = jnp.pad(x, ((0, 0), (0, 0), (0, 1)))[:, :, 1:]   # x[l+1] (tap 2)
    x_stack = jnp.concatenate([x0, x, x2], axis=1)        # (B, 3*C_in, L)
    # Lane-dense layout: fold the batch into the lane dimension.
    x_lane = x_stack.transpose(1, 0, 2).reshape(3 * C_in, BL)

    w1_cols = jnp.concatenate([w1[:, :, 0], w1[:, :, 1], w1[:, :, 2]], axis=1)
    w2_rows = jnp.concatenate([w2[:, :, 0], w2[:, :, 1], w2[:, :, 2]], axis=0)
    b1c = b1[:, None]                 # (C_out, 1)
    b2c = b2[:, None]

    # Constant block-diagonal shift matrices (hoisted out of the kernel body).
    s_r, s_l = _block_diag_shift_mats(B, L)

    full = lambda shape: pl.BlockSpec(shape, lambda i: (0, 0))

    flops = (2 * (3 * C_in) * C_out * BL        # layer-1 matmul
             + 2 * C_out * (3 * C_out) * BL     # layer-2 tap matmul
             + 2 * 2 * C_out * BL * BL)         # two shift matmuls
    bytes_accessed = 4 * (x_lane.size + w1_cols.size + b1c.size + w2_rows.size
                          + b2c.size + s_r.size + s_l.size + C_out * BL)

    out_lane = pl.pallas_call(
        _double_conv1d_kernel,
        out_shape=jax.ShapeDtypeStruct((C_out, BL), jnp.float32),
        grid=(1,),
        in_specs=[
            full((3 * C_in, BL)),        # pre-shifted, tap-stacked x
            full((C_out, 3 * C_in)),     # folded conv1 weight (taps along cols)
            full((C_out, 1)),            # folded conv1 bias
            full((3 * C_out, C_out)),    # folded conv2 weight (taps along rows)
            full((C_out, 1)),            # folded conv2 bias
            full((BL, BL)),              # block-diag shift-right
            full((BL, BL)),              # block-diag shift-left
        ],
        out_specs=full((C_out, BL)),
        compiler_params=pltpu.CompilerParams(dimension_semantics=("arbitrary",)),
        cost_estimate=pl.CostEstimate(flops=flops, transcendentals=0,
                                      bytes_accessed=bytes_accessed),
    )(x_lane, w1_cols, b1c, w2_rows, b2c, s_r, s_l)

    # (C_out, B*L) -> (B, C_out, L)
    return out_lane.reshape(C_out, B, L).transpose(1, 0, 2)


# --------------------------- pure-JAX reference -------------------------------

def reference_forward(x, p, eps=1e-5):
    def conv_bn_relu(v, w, b, g, beta, m, var):
        y = jax.lax.conv_general_dilated(
            v, w, window_strides=(1,), padding=((1, 1),),
            dimension_numbers=("NCH", "OIH", "NCH")) + b[None, :, None]
        scale = (g * jax.lax.rsqrt(var + eps))[None, :, None]
        y = (y - m[None, :, None]) * scale + beta[None, :, None]
        return jnp.maximum(y, 0.0)

    h = conv_bn_relu(x, p["w1"], p["b1"], p["g1"], p["beta1"], p["m1"], p["v1"])
    return conv_bn_relu(h, p["w2"], p["b2"], p["g2"], p["beta2"], p["m2"], p["v2"])


# ------------------------------ parameter init --------------------------------

def init_params(key, C_in, C_out):
    ks = jax.random.split(key, 12)
    k1 = 1.0 / math.sqrt(C_in * 3)
    k2 = 1.0 / math.sqrt(C_out * 3)
    return {
        "w1": jax.random.normal(ks[0], (C_out, C_in, 3), jnp.float32) * k1,
        "b1": jax.random.normal(ks[1], (C_out,), jnp.float32) * 0.1,
        "g1": 1.0 + 0.1 * jax.random.normal(ks[2], (C_out,), jnp.float32),
        "beta1": 0.1 * jax.random.normal(ks[3], (C_out,), jnp.float32),
        "m1": 0.1 * jax.random.normal(ks[4], (C_out,), jnp.float32),
        "v1": 1.0 + 0.5 * jax.random.uniform(ks[5], (C_out,), jnp.float32),
        "w2": jax.random.normal(ks[6], (C_out, C_out, 3), jnp.float32) * k2,
        "b2": jax.random.normal(ks[7], (C_out,), jnp.float32) * 0.1,
        "g2": 1.0 + 0.1 * jax.random.normal(ks[8], (C_out,), jnp.float32),
        "beta2": 0.1 * jax.random.normal(ks[9], (C_out,), jnp.float32),
        "m2": 0.1 * jax.random.normal(ks[10], (C_out,), jnp.float32),
        "v2": 1.0 + 0.5 * jax.random.uniform(ks[11], (C_out,), jnp.float32),
    }


# ------------------------------------ main -------------------------------------

if __name__ == "__main__":
    B, C_in, C_out, L = 2, 4, 8, 16
    key = jax.random.PRNGKey(0)
    kx, kp = jax.random.split(key)
    x = jax.random.normal(kx, (B, C_in, L), jnp.float32)
    params = init_params(kp, C_in, C_out)

    fwd = jax.jit(double_conv1d_forward)
    out = jax.block_until_ready(fwd(x, params))

    ref = jax.block_until_ready(reference_forward(x, params))
    assert out.shape == ref.shape, (out.shape, ref.shape)
    assert bool(jnp.all(jnp.isfinite(out)))
    assert bool(jnp.allclose(out, ref, atol=1e-3, rtol=1e-3)), float(
        jnp.max(jnp.abs(out - ref)))

    print("KERNEL_OK")
</pallas_src>

<mosaic_0001>
module attributes {stable_mosaic.version = 11 : i64} {
  func.func @_double_conv1d_kernel(%arg0: i32, %arg1: memref<12x32xf32, #tpu.memory_space<vmem>>, %arg2: memref<8x12xf32, #tpu.memory_space<vmem>>, %arg3: memref<8x1xf32, #tpu.memory_space<vmem>>, %arg4: memref<24x8xf32, #tpu.memory_space<vmem>>, %arg5: memref<8x1xf32, #tpu.memory_space<vmem>>, %arg6: memref<32x32xf32, #tpu.memory_space<vmem>>, %arg7: memref<32x32xf32, #tpu.memory_space<vmem>>, %arg8: memref<8x32xf32, #tpu.memory_space<vmem>>) attributes {dimension_semantics = [#tpu.dimension_semantics<arbitrary>], iteration_bounds = array<i64: 1>, scalar_prefetch = 0 : i64, scratch_operands = 0 : i64, tpu.core_type = #tpu.core_type<tc>, window_params = [{pipeline_mode = #tpu.pipeline_mode<synchronous>, transform_indices = @transform_0, window_bounds = array<i64: 12, 32>}, {pipeline_mode = #tpu.pipeline_mode<synchronous>, transform_indices = @transform_1, window_bounds = array<i64: 8, 12>}, {pipeline_mode = #tpu.pipeline_mode<synchronous>, transform_indices = @transform_2, window_bounds = array<i64: 8, 1>}, {pipeline_mode = #tpu.pipeline_mode<synchronous>, transform_indices = @transform_3, window_bounds = array<i64: 24, 8>}, {pipeline_mode = #tpu.pipeline_mode<synchronous>, transform_indices = @transform_4, window_bounds = array<i64: 8, 1>}, {pipeline_mode = #tpu.pipeline_mode<synchronous>, transform_indices = @transform_5, window_bounds = array<i64: 32, 32>}, {pipeline_mode = #tpu.pipeline_mode<synchronous>, transform_indices = @transform_6, window_bounds = array<i64: 32, 32>}, {pipeline_mode = #tpu.pipeline_mode<synchronous>, transform_indices = @transform_7, window_bounds = array<i64: 8, 32>}]} {
    %c0 = arith.constant 0 : index
    %c0_0 = arith.constant 0 : index
    %0 = vector.load %arg2[%c0, %c0_0] : memref<8x12xf32, #tpu.memory_space<vmem>>, vector<8x12xf32>
    %c0_1 = arith.constant 0 : index
    %c0_2 = arith.constant 0 : index
    %1 = vector.load %arg1[%c0_1, %c0_2] : memref<12x32xf32, #tpu.memory_space<vmem>>, vector<12x32xf32>
    %cst = arith.constant dense<0.000000e+00> : vector<8x32xf32>
    %2 = tpu.matmul %0, %1, %cst {dimension_numbers = #tpu.dot_dimension_numbers<[1], [0], [0], [1], [0, 0, 1, 1], [], []>} : vector<8x12xf32>, vector<12x32xf32>, vector<8x32xf32> -> vector<8x32xf32>
    %c0_3 = arith.constant 0 : index
    %c0_4 = arith.constant 0 : index
    %3 = vector.load %arg3[%c0_3, %c0_4] : memref<8x1xf32, #tpu.memory_space<vmem>>, vector<8x1xf32>
    %4 = vector.broadcast %3 : vector<8x1xf32> to vector<8x32xf32>
    %5 = arith.addf %2, %4 : vector<8x32xf32>
    %cst_5 = arith.constant 0.000000e+00 : f32
    %6 = vector.broadcast %cst_5 : f32 to vector<8x32xf32>
    %7 = arith.maximumf %5, %6 : vector<8x32xf32>
    %c0_6 = arith.constant 0 : index
    %c0_7 = arith.constant 0 : index
    %8 = vector.load %arg4[%c0_6, %c0_7] : memref<24x8xf32, #tpu.memory_space<vmem>>, vector<24x8xf32>
    %cst_8 = arith.constant dense<0.000000e+00> : vector<24x32xf32>
    %9 = tpu.matmul %8, %7, %cst_8 {dimension_numbers = #tpu.dot_dimension_numbers<[1], [0], [0], [1], [0, 0, 1, 1], [], []>} : vector<24x8xf32>, vector<8x32xf32>, vector<24x32xf32> -> vector<24x32xf32>
    %10 = vector.extract_strided_slice %9 {offsets = [0, 0], sizes = [8, 32], strides = [1, 1]} : vector<24x32xf32> to vector<8x32xf32>
    %c0_9 = arith.constant 0 : index
    %c0_10 = arith.constant 0 : index
    %11 = vector.load %arg6[%c0_9, %c0_10] : memref<32x32xf32, #tpu.memory_space<vmem>>, vector<32x32xf32>
    %cst_11 = arith.constant dense<0.000000e+00> : vector<8x32xf32>
    %12 = tpu.matmul %10, %11, %cst_11 {dimension_numbers = #tpu.dot_dimension_numbers<[1], [0], [0], [1], [0, 0, 1, 1], [], []>} : vector<8x32xf32>, vector<32x32xf32>, vector<8x32xf32> -> vector<8x32xf32>
    %13 = vector.extract_strided_slice %9 {offsets = [8, 0], sizes = [8, 32], strides = [1, 1]} : vector<24x32xf32> to vector<8x32xf32>
    %14 = arith.addf %12, %13 : vector<8x32xf32>
    %15 = vector.extract_strided_slice %9 {offsets = [16, 0], sizes = [8, 32], strides = [1, 1]} : vector<24x32xf32> to vector<8x32xf32>
    %c0_12 = arith.constant 0 : index
    %c0_13 = arith.constant 0 : index
    %16 = vector.load %arg7[%c0_12, %c0_13] : memref<32x32xf32, #tpu.memory_space<vmem>>, vector<32x32xf32>
    %cst_14 = arith.constant dense<0.000000e+00> : vector<8x32xf32>
    %17 = tpu.matmul %15, %16, %cst_14 {dimension_numbers = #tpu.dot_dimension_numbers<[1], [0], [0], [1], [0, 0, 1, 1], [], []>} : vector<8x32xf32>, vector<32x32xf32>, vector<8x32xf32> -> vector<8x32xf32>
    %18 = arith.addf %14, %17 : vector<8x32xf32>
    %c0_15 = arith.constant 0 : index
    %c0_16 = arith.constant 0 : index
    %19 = vector.load %arg5[%c0_15, %c0_16] : memref<8x1xf32, #tpu.memory_space<vmem>>, vector<8x1xf32>
    %20 = vector.broadcast %19 : vector<8x1xf32> to vector<8x32xf32>
    %21 = arith.addf %18, %20 : vector<8x32xf32>
    %cst_17 = arith.constant 0.000000e+00 : f32
    %22 = vector.broadcast %cst_17 : f32 to vector<8x32xf32>
    %23 = arith.maximumf %21, %22 : vector<8x32xf32>
    %c0_18 = arith.constant 0 : index
    %c0_19 = arith.constant 0 : index
    %24 = vector.load %arg8[%c0_18, %c0_19] : memref<8x32xf32, #tpu.memory_space<vmem>>, vector<8x32xf32>
    tpu.vector_store %arg8[%c0_18, %c0_19], %23 {strides = array<i32>} : memref<8x32xf32, #tpu.memory_space<vmem>>, vector<8x32xf32>,
    return
  }
  func.func @transform_0(%arg0: i32) -> (i32, i32) {
    %c0_i32 = arith.constant 0 : i32
    %c0_i32_0 = arith.constant 0 : i32
    %c0_i32_1 = arith.constant 0 : i32
    return %c0_i32, %c0_i32_0 : i32, i32
  }
  func.func @transform_1(%arg0: i32) -> (i32, i32) {
    %c0_i32 = arith.constant 0 : i32
    %c0_i32_0 = arith.constant 0 : i32
    %c0_i32_1 = arith.constant 0 : i32
    return %c0_i32, %c0_i32_0 : i32, i32
  }
  func.func @transform_2(%arg0: i32) -> (i32, i32) {
    %c0_i32 = arith.constant 0 : i32
    %c0_i32_0 = arith.constant 0 : i32
    %c0_i32_1 = arith.constant 0 : i32
    return %c0_i32, %c0_i32_0 : i32, i32
  }
  func.func @transform_3(%arg0: i32) -> (i32, i32) {
    %c0_i32 = arith.constant 0 : i32
    %c0_i32_0 = arith.constant 0 : i32
    %c0_i32_1 = arith.constant 0 : i32
    return %c0_i32, %c0_i32_0 : i32, i32
  }
  func.func @transform_4(%arg0: i32) -> (i32, i32) {
    %c0_i32 = arith.constant 0 : i32
    %c0_i32_0 = arith.constant 0 : i32
    %c0_i32_1 = arith.constant 0 : i32
    return %c0_i32, %c0_i32_0 : i32, i32
  }
  func.func @transform_5(%arg0: i32) -> (i32, i32) {
    %c0_i32 = arith.constant 0 : i32
    %c0_i32_0 = arith.constant 0 : i32
    %c0_i32_1 = arith.constant 0 : i32
    return %c0_i32, %c0_i32_0 : i32, i32
  }
  func.func @transform_6(%arg0: i32) -> (i32, i32) {
    %c0_i32 = arith.constant 0 : i32
    %c0_i32_0 = arith.constant 0 : i32
    %c0_i32_1 = arith.constant 0 : i32
    return %c0_i32, %c0_i32_0 : i32, i32
  }
  func.func @transform_7(%arg0: i32) -> (i32, i32) {
    %c0_i32 = arith.constant 0 : i32
    %c0_i32_0 = arith.constant 0 : i32
    %c0_i32_1 = arith.constant 0 : i32
    return %c0_i32, %c0_i32_0 : i32, i32
  }
}

</mosaic_0001>

<llo_original>
// kernel: double_conv1d_forward.1
$region0: #{double_conv1d_forward.1}
  #allocation0 [shape = 'u32[]', space=smem, size = 0x4, offset = 0x4, fixed_abs, tag = 'smem constant byte address 0x4 - core index']
  #allocation1 [shape = 'u32[144,128]{1,0:T(1,128)}', space=vmem, size = 0x12000, scoped, tag = 'internal scratch']
  %s0 = inlined_call_operand.vmem [shape: f32[12,32], index: 0, kind: input, shape index: {}]
  %s1 = inlined_call_operand.vmem [shape: f32[8,12], index: 1, kind: input, shape index: {}]
  %s2 = inlined_call_operand.vmem [shape: f32[8,1], index: 2, kind: input, shape index: {}]
  %s3 = inlined_call_operand.vmem [shape: f32[24,8], index: 3, kind: input, shape index: {}]
  %s4 = inlined_call_operand.vmem [shape: f32[8,1], index: 4, kind: input, shape index: {}]
  %s5 = inlined_call_operand.vmem [shape: f32[32,32], index: 5, kind: input, shape index: {}]
  %s6 = inlined_call_operand.vmem [shape: f32[32,32], index: 6, kind: input, shape index: {}]
  %s7 = inlined_call_operand.vmem [shape: f32[8,32], index: 7, kind: output, shape index: {}]
  %s8 = sld [smem:[#allocation0]]
  $region38: #{double_conv1d_forward.1} parent=0
    _
  %s10 = ssub.s32 1, %s8
  %s11 = scalar_select 0, %s10, %s8
  // Predicated region
  $region2: #{double_conv1d_forward.1} parent=0 // pred_check
    _
  $region3: #{double_conv1d_forward.1} parent=0 // pred_check_branch
    %13 = sbr.rel (0) target = $region5
  $region4: #{double_conv1d_forward.1} parent=0 // pred_region
    _
  $region5: #{double_conv1d_forward.1} parent=0 // pred_fallthru
    _
  // Predicated region
  $region6: #{double_conv1d_forward.1} parent=0 // pred_check
    _
  $region7: #{double_conv1d_forward.1} parent=0 // pred_check_branch
    %15 = sbr.rel (0) target = $region9
  $region8: #{double_conv1d_forward.1} parent=0 // pred_region
    _
  $region9: #{double_conv1d_forward.1} parent=0 // pred_fallthru
    _
  // Predicated region
  $region10: #{double_conv1d_forward.1} parent=0 // pred_check
    _
  $region11: #{double_conv1d_forward.1} parent=0 // pred_check_branch
    %17 = sbr.rel (0) target = $region13
  $region12: #{double_conv1d_forward.1} parent=0 // pred_region
    _
  $region13: #{double_conv1d_forward.1} parent=0 // pred_fallthru
    _
  // Predicated region
  $region14: #{double_conv1d_forward.1} parent=0 // pred_check
    _
  $region15: #{double_conv1d_forward.1} parent=0 // pred_check_branch
    %19 = sbr.rel (0) target = $region17
  $region16: #{double_conv1d_forward.1} parent=0 // pred_region
    _
  $region17: #{double_conv1d_forward.1} parent=0 // pred_fallthru
    _
  // Predicated region
  $region18: #{double_conv1d_forward.1} parent=0 // pred_check
    _
  $region19: #{double_conv1d_forward.1} parent=0 // pred_check_branch
    %21 = sbr.rel (0) target = $region21
  $region20: #{double_conv1d_forward.1} parent=0 // pred_region
    _
  $region21: #{double_conv1d_forward.1} parent=0 // pred_fallthru
    _
  // Predicated region
  $region22: #{double_conv1d_forward.1} parent=0 // pred_check
    _
  $region23: #{double_conv1d_forward.1} parent=0 // pred_check_branch
    %23 = sbr.rel (0) target = $region25
  $region24: #{double_conv1d_forward.1} parent=0 // pred_region
    _
  $region25: #{double_conv1d_forward.1} parent=0 // pred_fallthru
    _
  // Predicated region
  $region26: #{double_conv1d_forward.1} parent=0 // pred_check
    _
  $region27: #{double_conv1d_forward.1} parent=0 // pred_check_branch
    %25 = sbr.rel (0) target = $region29
  $region28: #{double_conv1d_forward.1} parent=0 // pred_region
    _
  $region29: #{double_conv1d_forward.1} parent=0 // pred_fallthru
    _
  %v26 = vld [vmem:[%s1] sm:$0xff]
  %v27 = vld [vmem:[%s0] sm:$0xff]
  %v28 = vld [vmem:[%s0 + $0x8] sm:$0xf]
  %v29 = vld [vmem:[%s2] sm:$0xff]
  %31 = vset.pattern.permute.xlu0 0
  %32 = vperm.xlu0 %31, %v29
  %v33 = vpop.permute.xlu0 %32
  %vm35 = vcmask 97280
  %v37 = vsel %vm35, %v26, 0
  %vm39 = vcmask 1043456
  %v41 = vsel %vm39, %v28, 0
  %43 = vmatprep.subr.mxu0 0.0
  %44 = vmatpush1.msra.mxu0 0.0
  %45 = vmatprep.subr.mxu0 0.0
  %46 = vmatpush1.msra.mxu0 0.0
  %47 = vmatprep.subr.mxu0 0.0
  %48 = vmatpush1.msra.mxu0 0.0
  %49 = vmatprep.subr.mxu0 0.0
  %50 = vmatpush1.msra.mxu0 0.0
  %51 = vmatprep.subr.mxu0 0.0
  %52 = vmatpush1.msra.mxu0 0.0
  %53 = vmatprep.subr.mxu0 0.0
  %54 = vmatpush1.msra.mxu0 0.0
  %55 = vmatprep.subr.mxu0 0.0
  %56 = vmatpush1.msra.mxu0 0.0
  %57 = vmatprep.subr.mxu0 0.0
  %58 = vmatpush1.msra.mxu0 0.0
  %59 = vmatprep.subr.mxu0 0.0
  %60 = vmatpush1.msra.mxu0 0.0
  %61 = vmatprep.subr.mxu0 0.0
  %62 = vmatpush1.msra.mxu0 0.0
  %63 = vmatprep.subr.mxu0 0.0
  %64 = vmatpush1.msra.mxu0 0.0
  %65 = vmatprep.subr.mxu0 0.0
  %66 = vmatpush1.msra.mxu0 0.0
  %67 = vmatprep.subr.mxu0 0.0
  %68 = vmatpush1.msra.mxu0 0.0
  %69 = vmatprep.subr.mxu0 0.0
  %70 = vmatpush1.msra.mxu0 0.0
  %71 = vmatprep.subr.mxu0 0.0
  %72 = vmatpush1.msra.mxu0 %v41
  %73 = vmatprep.subr.mxu0 0.0
  %74 = vmatpush1.msra.mxu0 %v27
  %75 = vmatprep.subr.mxu0 0.0
  %76 = vmatpush2.msra.mxu0 0.0
  %77 = vmatprep.subr.mxu0 0.0
  %78 = vmatpush2.msra.mxu0 0.0
  %79 = vmatprep.subr.mxu0 0.0
  %80 = vmatpush2.msra.mxu0 0.0
  %81 = vmatprep.subr.mxu0 0.0
  %82 = vmatpush2.msra.mxu0 0.0
  %83 = vmatprep.subr.mxu0 0.0
  %84 = vmatpush2.msra.mxu0 0.0
  %85 = vmatprep.subr.mxu0 0.0
  %86 = vmatpush2.msra.mxu0 0.0
  %87 = vmatprep.subr.mxu0 0.0
  %88 = vmatpush2.msra.mxu0 0.0
  %89 = vmatprep.subr.mxu0 0.0
  %90 = vmatpush2.msra.mxu0 0.0
  %91 = vmatprep.subr.mxu0 0.0
  %92 = vmatpush2.msra.mxu0 0.0
  %93 = vmatprep.subr.mxu0 0.0
  %94 = vmatpush2.msra.mxu0 0.0
  %95 = vmatprep.subr.mxu0 0.0
  %96 = vmatpush2.msra.mxu0 0.0
  %97 = vmatprep.subr.mxu0 0.0
  %98 = vmatpush2.msra.mxu0 0.0
  %99 = vmatprep.subr.mxu0 0.0
  %100 = vmatpush2.msra.mxu0 0.0
  %101 = vmatprep.subr.mxu0 0.0
  %102 = vmatpush2.msra.mxu0 0.0
  %103 = vmatprep.subr.mxu0 0.0
  %104 = vmatpush2.msra.mxu0 0.0
  %105 = vmatprep.subr.mxu0 0.0
  %106 = vmatpush2.msra.mxu0 0.0
  %107 = vmatprep.mubr.f32.mxu0 0.0
  %108 = vmatmul.mubr.f32.gmra.mxu0 %v37
  %v109 = vpop.f32.mrf.mxu0
  %v110 = vadd.f32 %v33, %v109
  %v111 = vpop.f32.mrf.mxu0
  %112 = vdwg.mxu0
  %v113 = vmax.f32 %v110, 0.0
  %v114 = vld [vmem:[%s3] sm:$0xff]
  %v115 = vld [vmem:[%s3 + $0x8] sm:$0xff]
  %v116 = vld [vmem:[%s3 + $0x10] sm:$0xff]
  %vm117 = vcmask 64512
  %v119 = vsel %vm117, %v114, 0
  %v122 = vsel %vm117, %v115, 0
  %v125 = vsel %vm117, %v116, 0
  %127 = vmatprep.subr.mxu0 0.0
  %128 = vmatpush1.msra.mxu0 0.0
  %129 = vmatprep.subr.mxu0 0.0
  %130 = vmatpush1.msra.mxu0 0.0
  %131 = vmatprep.subr.mxu0 0.0
  %132 = vmatpush1.msra.mxu0 0.0
  %133 = vmatprep.subr.mxu0 0.0
  %134 = vmatpush1.msra.mxu0 0.0
  %135 = vmatprep.subr.mxu0 0.0
  %136 = vmatpush1.msra.mxu0 0.0
  %137 = vmatprep.subr.mxu0 0.0
  %138 = vmatpush1.msra.mxu0 0.0
  %139 = vmatprep.subr.mxu0 0.0
  %140 = vmatpush1.msra.mxu0 0.0
  %141 = vmatprep.subr.mxu0 0.0
  %142 = vmatpush1.msra.mxu0 0.0
  %143 = vmatprep.subr.mxu0 0.0
  %144 = vmatpush1.msra.mxu0 0.0
  %145 = vmatprep.subr.mxu0 0.0
  %146 = vmatpush1.msra.mxu0 0.0
  %147 = vmatprep.subr.mxu0 0.0
  %148 = vmatpush1.msra.mxu0 0.0
  %149 = vmatprep.subr.mxu0 0.0
  %150 = vmatpush1.msra.mxu0 0.0
  %151 = vmatprep.subr.mxu0 0.0
  %152 = vmatpush1.msra.mxu0 0.0
  %153 = vmatprep.subr.mxu0 0.0
  %154 = vmatpush1.msra.mxu0 0.0
  %155 = vmatprep.subr.mxu0 0.0
  %156 = vmatpush1.msra.mxu0 0.0
  %157 = vmatprep.subr.mxu0 0.0
  %158 = vmatpush1.msra.mxu0 %v113
  %159 = vmatprep.subr.mxu0 0.0
  %160 = vmatpush2.msra.mxu0 0.0
  %161 = vmatprep.subr.mxu0 0.0
  %162 = vmatpush2.msra.mxu0 0.0
  %163 = vmatprep.subr.mxu0 0.0
  %164 = vmatpush2.msra.mxu0 0.0
  %165 = vmatprep.subr.mxu0 0.0
  %166 = vmatpush2.msra.mxu0 0.0
  %167 = vmatprep.subr.mxu0 0.0
  %168 = vmatpush2.msra.mxu0 0.0
  %169 = vmatprep.subr.mxu0 0.0
  %170 = vmatpush2.msra.mxu0 0.0
  %171 = vmatprep.subr.mxu0 0.0
  %172 = vmatpush2.msra.mxu0 0.0
  %173 = vmatprep.subr.mxu0 0.0
  %174 = vmatpush2.msra.mxu0 0.0
  %175 = vmatprep.subr.mxu0 0.0
  %176 = vmatpush2.msra.mxu0 0.0
  %177 = vmatprep.subr.mxu0 0.0
  %178 = vmatpush2.msra.mxu0 0.0
  %179 = vmatprep.subr.mxu0 0.0
  %180 = vmatpush2.msra.mxu0 0.0
  %181 = vmatprep.subr.mxu0 0.0
  %182 = vmatpush2.msra.mxu0 0.0
  %183 = vmatprep.subr.mxu0 0.0
  %184 = vmatpush2.msra.mxu0 0.0
  %185 = vmatprep.subr.mxu0 0.0
  %186 = vmatpush2.msra.mxu0 0.0
  %187 = vmatprep.subr.mxu0 0.0
  %188 = vmatpush2.msra.mxu0 0.0
  %189 = vmatprep.subr.mxu0 0.0
  %190 = vmatpush2.msra.mxu0 0.0
  %191 = vmatprep.mubr.f32.mxu0 0.0
  %192 = vmatmul.mubr.f32.gmra.mxu0 %v119
  %v193 = vpop.f32.mrf.mxu0
  %v194 = vadd.f32 0.0, %v193
  %v195 = vpop.f32.mrf.mxu0
  %196 = vmatprep.mubr.f32.mxu0 0.0
  %197 = vmatmul.mubr.f32.gmra.mxu0 %v122
  %v198 = vpop.f32.mrf.mxu0
  %v199 = vadd.f32 0.0, %v198
  %v200 = vpop.f32.mrf.mxu0
  %201 = vmatprep.mubr.f32.mxu0 0.0
  %202 = vmatmul.mubr.f32.gmra.mxu0 %v125
  %v203 = vpop.f32.mrf.mxu0
  %v204 = vadd.f32 0.0, %v203
  %v205 = vpop.f32.mrf.mxu0
  %206 = vdwg.mxu0
  %v207 = vld [vmem:[%s5] sm:$0xff]
  %v208 = vld [vmem:[%s5 + $0x8] sm:$0xff]
  %v209 = vld [vmem:[%s5 + $0x10] sm:$0xff]
  %v210 = vld [vmem:[%s5 + $0x18] sm:$0xff]
  %vm211 = vcmask 261120
  %v213 = vsel %vm211, %v194, 0
  %215 = vmatprep.subr.mxu0 0.0
  %216 = vmatpush1.msra.mxu0 0.0
  %217 = vmatprep.subr.mxu0 0.0
  %218 = vmatpush1.msra.mxu0 0.0
  %219 = vmatprep.subr.mxu0 0.0
  %220 = vmatpush1.msra.mxu0 0.0
  %221 = vmatprep.subr.mxu0 0.0
  %222 = vmatpush1.msra.mxu0 0.0
  %223 = vmatprep.subr.mxu0 0.0
  %224 = vmatpush1.msra.mxu0 0.0
  %225 = vmatprep.subr.mxu0 0.0
  %226 = vmatpush1.msra.mxu0 0.0
  %227 = vmatprep.subr.mxu0 0.0
  %228 = vmatpush1.msra.mxu0 0.0
  %229 = vmatprep.subr.mxu0 0.0
  %230 = vmatpush1.msra.mxu0 0.0
  %231 = vmatprep.subr.mxu0 0.0
  %232 = vmatpush1.msra.mxu0 0.0
  %233 = vmatprep.subr.mxu0 0.0
  %234 = vmatpush1.msra.mxu0 0.0
  %235 = vmatprep.subr.mxu0 0.0
  %236 = vmatpush1.msra.mxu0 0.0
  %237 = vmatprep.subr.mxu0 0.0
  %238 = vmatpush1.msra.mxu0 0.0
  %239 = vmatprep.subr.mxu0 0.0
  %240 = vmatpush1.msra.mxu0 %v210
  %241 = vmatprep.subr.mxu0 0.0
  %242 = vmatpush1.msra.mxu0 %v209
  %243 = vmatprep.subr.mxu0 0.0
  %244 = vmatpush1.msra.mxu0 %v208
  %245 = vmatprep.subr.mxu0 0.0
  %246 = vmatpush1.msra.mxu0 %v207
  %247 = vmatprep.subr.mxu0 0.0
  %248 = vmatpush2.msra.mxu0 0.0
  %249 = vmatprep.subr.mxu0 0.0
  %250 = vmatpush2.msra.mxu0 0.0
  %251 = vmatprep.subr.mxu0 0.0
  %252 = vmatpush2.msra.mxu0 0.0
  %253 = vmatprep.subr.mxu0 0.0
  %254 = vmatpush2.msra.mxu0 0.0
  %255 = vmatprep.subr.mxu0 0.0
  %256 = vmatpush2.msra.mxu0 0.0
  %257 = vmatprep.subr.mxu0 0.0
  %258 = vmatpush2.msra.mxu0 0.0
  %259 = vmatprep.subr.mxu0 0.0
  %260 = vmatpush2.msra.mxu0 0.0
  %261 = vmatprep.subr.mxu0 0.0
  %262 = vmatpush2.msra.mxu0 0.0
  %263 = vmatprep.subr.mxu0 0.0
  %264 = vmatpush2.msra.mxu0 0.0
  %265 = vmatprep.subr.mxu0 0.0
  %266 = vmatpush2.msra.mxu0 0.0
  %267 = vmatprep.subr.mxu0 0.0
  %268 = vmatpush2.msra.mxu0 0.0
  %269 = vmatprep.subr.mxu0 0.0
  %270 = vmatpush2.msra.mxu0 0.0
  %271 = vmatprep.subr.mxu0 0.0
  %272 = vmatpush2.msra.mxu0 0.0
  %273 = vmatprep.subr.mxu0 0.0
  %274 = vmatpush2.msra.mxu0 0.0
  %275 = vmatprep.subr.mxu0 0.0
  %276 = vmatpush2.msra.mxu0 0.0
  %277 = vmatprep.subr.mxu0 0.0
  %278 = vmatpush2.msra.mxu0 0.0
  %279 = vmatprep.mubr.f32.mxu0 0.0
  %280 = vmatmul.mubr.f32.gmra.mxu0 %v213
  %v281 = vpop.f32.mrf.mxu0
  %v282 = vadd.f32 %v199, %v281
  %v283 = vpop.f32.mrf.mxu0
  %284 = vdwg.mxu0
  %v285 = vld [vmem:[%s6] sm:$0xff]
  %v286 = vld [vmem:[%s6 + $0x8] sm:$0xff]
  %v287 = vld [vmem:[%s6 + $0x10] sm:$0xff]
  %v288 = vld [vmem:[%s6 + $0x18] sm:$0xff]
  %v290 = vsel %vm211, %v204, 0
  %292 = vmatprep.subr.mxu0 0.0
  %293 = vmatpush1.msra.mxu0 0.0
  %294 = vmatprep.subr.mxu0 0.0
  %295 = vmatpush1.msra.mxu0 0.0
  %296 = vmatprep.subr.mxu0 0.0
  %297 = vmatpush1.msra.mxu0 0.0
  %298 = vmatprep.subr.mxu0 0.0
  %299 = vmatpush1.msra.mxu0 0.0
  %300 = vmatprep.subr.mxu0 0.0
  %301 = vmatpush1.msra.mxu0 0.0
  %302 = vmatprep.subr.mxu0 0.0
  %303 = vmatpush1.msra.mxu0 0.0
  %304 = vmatprep.subr.mxu0 0.0
  %305 = vmatpush1.msra.mxu0 0.0
  %306 = vmatprep.subr.mxu0 0.0
  %307 = vmatpush1.msra.mxu0 0.0
  %308 = vmatprep.subr.mxu0 0.0
  %309 = vmatpush1.msra.mxu0 0.0
  %310 = vmatprep.subr.mxu0 0.0
  %311 = vmatpush1.msra.mxu0 0.0
  %312 = vmatprep.subr.mxu0 0.0
  %313 = vmatpush1.msra.mxu0 0.0
  %314 = vmatprep.subr.mxu0 0.0
  %315 = vmatpush1.msra.mxu0 0.0
  %316 = vmatprep.subr.mxu0 0.0
  %317 = vmatpush1.msra.mxu0 %v288
  %318 = vmatprep.subr.mxu0 0.0
  %319 = vmatpush1.msra.mxu0 %v287
  %320 = vmatprep.subr.mxu0 0.0
  %321 = vmatpush1.msra.mxu0 %v286
  %322 = vmatprep.subr.mxu0 0.0
  %323 = vmatpush1.msra.mxu0 %v285
  %324 = vmatprep.subr.mxu0 0.0
  %325 = vmatpush2.msra.mxu0 0.0
  %326 = vmatprep.subr.mxu0 0.0
  %327 = vmatpush2.msra.mxu0 0.0
  %328 = vmatprep.subr.mxu0 0.0
  %329 = vmatpush2.msra.mxu0 0.0
  %330 = vmatprep.subr.mxu0 0.0
  %331 = vmatpush2.msra.mxu0 0.0
  %332 = vmatprep.subr.mxu0 0.0
  %333 = vmatpush2.msra.mxu0 0.0
  %334 = vmatprep.subr.mxu0 0.0
  %335 = vmatpush2.msra.mxu0 0.0
  %336 = vmatprep.subr.mxu0 0.0
  %337 = vmatpush2.msra.mxu0 0.0
  %338 = vmatprep.subr.mxu0 0.0
  %339 = vmatpush2.msra.mxu0 0.0
  %340 = vmatprep.subr.mxu0 0.0
  %341 = vmatpush2.msra.mxu0 0.0
  %342 = vmatprep.subr.mxu0 0.0
  %343 = vmatpush2.msra.mxu0 0.0
  %344 = vmatprep.subr.mxu0 0.0
  %345 = vmatpush2.msra.mxu0 0.0
  %346 = vmatprep.subr.mxu0 0.0
  %347 = vmatpush2.msra.mxu0 0.0
  %348 = vmatprep.subr.mxu0 0.0
  %349 = vmatpush2.msra.mxu0 0.0
  %350 = vmatprep.subr.mxu0 0.0
  %351 = vmatpush2.msra.mxu0 0.0
  %352 = vmatprep.subr.mxu0 0.0
  %353 = vmatpush2.msra.mxu0 0.0
  %354 = vmatprep.subr.mxu0 0.0
  %355 = vmatpush2.msra.mxu0 0.0
  %356 = vmatprep.mubr.f32.mxu0 0.0
  %357 = vmatmul.mubr.f32.gmra.mxu0 %v290
  %v358 = vpop.f32.mrf.mxu0
  %v359 = vadd.f32 0.0, %v358
  %v360 = vpop.f32.mrf.mxu0
  %361 = vdwg.mxu0
  %v362 = vadd.f32 %v282, %v359
  %v363 = vld [vmem:[%s4] sm:$0xff]
  %365 = vset.pattern.permute.xlu0 0
  %366 = vperm.xlu0 %365, %v363
  %v367 = vpop.permute.xlu0 %366
  %v369 = vadd.f32 %v362, %v367
  %v370 = vmax.f32 %v369, 0.0
  %371 = vst.msk [vmem:[%s7] sm:$0xff] %vm211, %v370
  // Predicated region
  $region30: #{double_conv1d_forward.1} parent=0 // pred_check
    _
  $region31: #{double_conv1d_forward.1} parent=0 // pred_check_branch
    %373 = sbr.rel (0) target = $region33
  $region32: #{double_conv1d_forward.1} parent=0 // pred_region
    _
  $region33: #{double_conv1d_forward.1} parent=0 // pred_fallthru
    _
  // Predicated region
  $region34: #{double_conv1d_forward.1} parent=0 // pred_check
    _
  $region35: #{double_conv1d_forward.1} parent=0 // pred_check_branch
    %375 = sbr.rel (0) target = $region37
  $region36: #{double_conv1d_forward.1} parent=0 // pred_region
    _
  $region37: #{double_conv1d_forward.1} parent=0 // pred_fallthru
    _

</llo_original>
